<compile_context>
chip_gen: v7x
topology: tpu7x:2x2x1
jax: 0.10.0
libtpu: 0.0.40
codegen_flags: <defaults>
</compile_context>

<pallas_src>
import jax
import jax.numpy as jnp
from jax.experimental import pallas as pl
from jax.experimental.pallas import tpu as pltpu


def _round_up(x, m):
    return ((x + m - 1) // m) * m


def _linear_add_ref(x1, x2, weight, bias):
    # Plain-XLA path: used for the module's spec size (B=1) and tiny tails,
    # where kernel launch + DMA setup would dominate.
    return x1 @ weight.T + bias + x2


def linear_add_packed_kernel(x1_ref, w_ref, b_ref, x2_ref, o_ref):
    # x1_ref: (TB, pack*F_in)  w_ref: (pack*F_in, pack*F_out)
    # b_ref : (1, pack*F_out)  x2_ref/o_ref: (TB, pack*F_out)
    y = jnp.dot(x1_ref[...], w_ref[...], preferred_element_type=jnp.float32)
    o_ref[...] = (y + b_ref[...] + x2_ref[...]).astype(o_ref.dtype)


def model_forward(x1, x2, weight, bias, *, tb=2048, pack=8,
                  min_pallas_rows=1024, force_pallas=False):
    """y = x1 @ W^T + b + x2.

    x1, x2 : (B, F) float arrays
    weight : (F_out, F_in)  -- native PyTorch nn.Linear layout
    bias   : (F_out,)
    tb     : packed rows per grid step (multiple of 8; 2048 ~= 1 MiB/stream/block)
    pack   : samples packed per vreg row (8 -> 128 lanes; 16 -> 256 lanes for
             v6e/v7x's 256-wide MXU, still only 256 KiB of weight)
    """
    B, F_in = x1.shape
    F_out = weight.shape[0]
    bias1 = bias.reshape(-1)

    # Small problems (including the spec's B=1): a 1x16 matmul is pure launch
    # overhead for a custom kernel -> let XLA fuse it.
    if not force_pallas and B < min_pallas_rows:
        return _linear_add_ref(x1, x2, weight, bias1)

    tb = max(8, _round_up(tb, 8))
    B_main = (B // pack) * pack
    tail = B - B_main

    out_parts = []
    if B_main:
        Bp = B_main // pack                     # packed rows
        PF_in = pack * F_in
        PF_out = pack * F_out

        # Pure row-major reshapes: no data movement.
        x1p = x1[:B_main].reshape(Bp, PF_in)
        x2p = x2[:B_main].reshape(Bp, PF_out)

        # Block-diagonal packed weight / tiled bias, built once outside the kernel.
        # Adding the exact zeros of the off-diagonal blocks keeps results
        # bit-compatible with the unpacked contraction.
        w_blk = jnp.kron(jnp.eye(pack, dtype=weight.dtype), weight.T)  # (PF_in, PF_out)
        b_blk = jnp.tile(bias1, pack).reshape(1, PF_out)

        # Tile selection: biggest tile that keeps 3 streams x 2 buffers well
        # under the smallest scoped-VMEM default (v5e 16 MiB, v7x 32/64 MiB).
        TB = Bp if Bp <= tb else tb
        # Keep >= 2 grid steps when there's enough work so v7x's second
        # TensorCore isn't idle (tiles stay huge, so this is ~free).
        if Bp >= 512 and pl.cdiv(Bp, TB) < 2:
            TB = _round_up(pl.cdiv(Bp, 2), 8)
        grid = (pl.cdiv(Bp, TB),)               # partial last block handled by Pallas

        outp = pl.pallas_call(
            linear_add_packed_kernel,
            out_shape=jax.ShapeDtypeStruct((Bp, PF_out), x1.dtype),
            grid=grid,
            in_specs=[
                pl.BlockSpec((TB, PF_in), lambda i: (i, 0)),        # x1: streamed
                pl.BlockSpec((PF_in, PF_out), lambda i: (0, 0)),    # weight: resident
                pl.BlockSpec((1, PF_out), lambda i: (0, 0)),        # bias: resident
                pl.BlockSpec((TB, PF_out), lambda i: (i, 0)),       # x2: streamed
            ],
            out_specs=pl.BlockSpec((TB, PF_out), lambda i: (i, 0)),
            compiler_params=pltpu.CompilerParams(
                dimension_semantics=("parallel",),
            ),
        )(x1p, w_blk, b_blk, x2p)

        out_parts.append(outp.reshape(B_main, F_out))

    if tail:
        # < pack rows: handle outside the kernel (no full-array padding pass).
        out_parts.append(_linear_add_ref(x1[B_main:], x2[B_main:], weight, bias1))

    return out_parts[0] if len(out_parts) == 1 else jnp.concatenate(out_parts, axis=0)


if __name__ == "__main__":
    key = jax.random.PRNGKey(0)
    k1, k2, k3, k4, k5, k6, k7, k8 = jax.random.split(key, 8)

    F = 16
    # Deterministic params (mimics nn.Linear uniform(-1/sqrt(F), 1/sqrt(F))).
    bound = 1.0 / jnp.sqrt(jnp.float32(F))
    weight = jax.random.uniform(k3, (F, F), dtype=jnp.float32, minval=-bound, maxval=bound)
    bias = jax.random.uniform(k4, (F,), dtype=jnp.float32, minval=-bound, maxval=bound)

    # 1) Spec-sized case (B=1, matches the PyTorch module): auto-dispatch uses
    #    the plain-XLA path.
    x1 = jax.random.normal(k1, (1, F), dtype=jnp.float32)
    x2 = jax.random.normal(k2, (1, F), dtype=jnp.float32)
    out = model_forward(x1, x2, weight, bias)
    jax.block_until_ready(out)
    ref = x1 @ weight.T + bias + x2
    assert out.shape == ref.shape, "shape mismatch (B=1)"
    assert jnp.allclose(out, ref, atol=1e-5, rtol=1e-5), "mismatch vs reference (B=1)"

    # 2) Batched case forcing the Pallas path: B=300 exercises lane-packing,
    #    a multi-step grid with a partial last block, and the <8-row tail path.
    Bb = 300
    xb1 = jax.random.normal(k5, (Bb, F), dtype=jnp.float32)
    xb2 = jax.random.normal(k6, (Bb, F), dtype=jnp.float32)
    outb = model_forward(xb1, xb2, weight, bias, tb=16, force_pallas=True)
    jax.block_until_ready(outb)
    refb = xb1 @ weight.T + bias + xb2
    assert outb.shape == refb.shape, "shape mismatch (B=300)"
    assert jnp.allclose(outb, refb, atol=1e-5, rtol=1e-5), "mismatch vs reference (B=300)"

    # 3) Larger batch with default tiling: exercises the >=2-step grid split
    #    (megacore) at the default tile size.
    Bc = 4096
    xc1 = jax.random.normal(k7, (Bc, F), dtype=jnp.float32)
    xc2 = jax.random.normal(k8, (Bc, F), dtype=jnp.float32)
    outc = model_forward(xc1, xc2, weight, bias)
    jax.block_until_ready(outc)
    refc = xc1 @ weight.T + bias + xc2
    assert outc.shape == refc.shape, "shape mismatch (B=4096)"
    assert jnp.allclose(outc, refc, atol=1e-5, rtol=1e-5), "mismatch vs reference (B=4096)"

    print("KERNEL_OK")
</pallas_src>

<mosaic_0001>
module attributes {stable_mosaic.version = 11 : i64} {
  func.func @linear_add_packed_kernel(%arg0: i32, %arg1: memref<16x128xf32, #tpu.memory_space<vmem>>, %arg2: memref<128x128xf32, #tpu.memory_space<vmem>>, %arg3: memref<1x128xf32, #tpu.memory_space<vmem>>, %arg4: memref<16x128xf32, #tpu.memory_space<vmem>>, %arg5: memref<16x128xf32, #tpu.memory_space<vmem>>) attributes {dimension_semantics = [#tpu.dimension_semantics<parallel>], iteration_bounds = array<i64: 3>, scalar_prefetch = 0 : i64, scratch_operands = 0 : i64, tpu.core_type = #tpu.core_type<tc>, window_params = [{transform_indices = @transform_0, window_bounds = array<i64: 16, 128>}, {pipeline_mode = #tpu.pipeline_mode<synchronous>, transform_indices = @transform_1, window_bounds = array<i64: 128, 128>}, {pipeline_mode = #tpu.pipeline_mode<synchronous>, transform_indices = @transform_2, window_bounds = array<i64: 1, 128>}, {transform_indices = @transform_3, window_bounds = array<i64: 16, 128>}, {transform_indices = @transform_4, window_bounds = array<i64: 16, 128>}]} {
    %c0 = arith.constant 0 : index
    %c0_0 = arith.constant 0 : index
    %0 = vector.load %arg1[%c0, %c0_0] : memref<16x128xf32, #tpu.memory_space<vmem>>, vector<16x128xf32>
    %c0_1 = arith.constant 0 : index
    %c0_2 = arith.constant 0 : index
    %1 = vector.load %arg2[%c0_1, %c0_2] : memref<128x128xf32, #tpu.memory_space<vmem>>, vector<128x128xf32>
    %cst = arith.constant dense<0.000000e+00> : vector<16x128xf32>
    %2 = tpu.matmul %0, %1, %cst {dimension_numbers = #tpu.dot_dimension_numbers<[1], [0], [0], [1], [0, 0, 1, 1], [], []>} : vector<16x128xf32>, vector<128x128xf32>, vector<16x128xf32> -> vector<16x128xf32>
    %c0_3 = arith.constant 0 : index
    %c0_4 = arith.constant 0 : index
    %3 = vector.load %arg3[%c0_3, %c0_4] : memref<1x128xf32, #tpu.memory_space<vmem>>, vector<1x128xf32>
    %4 = vector.broadcast %3 : vector<1x128xf32> to vector<16x128xf32>
    %5 = arith.addf %2, %4 : vector<16x128xf32>
    %c0_5 = arith.constant 0 : index
    %c0_6 = arith.constant 0 : index
    %6 = vector.load %arg4[%c0_5, %c0_6] : memref<16x128xf32, #tpu.memory_space<vmem>>, vector<16x128xf32>
    %7 = arith.addf %5, %6 : vector<16x128xf32>
    %c0_7 = arith.constant 0 : index
    %c0_8 = arith.constant 0 : index
    %8 = vector.load %arg5[%c0_7, %c0_8] : memref<16x128xf32, #tpu.memory_space<vmem>>, vector<16x128xf32>
    tpu.vector_store %arg5[%c0_7, %c0_8], %7 {strides = array<i32>} : memref<16x128xf32, #tpu.memory_space<vmem>>, vector<16x128xf32>,
    return
  }
  func.func @transform_0(%arg0: i32) -> (i32, i32) {
    %c0_i32 = arith.constant 0 : i32
    %c0_i32_0 = arith.constant 0 : i32
    return %arg0, %c0_i32 : i32, i32
  }
  func.func @transform_1(%arg0: i32) -> (i32, i32) {
    %c0_i32 = arith.constant 0 : i32
    %c0_i32_0 = arith.constant 0 : i32
    %c0_i32_1 = arith.constant 0 : i32
    return %c0_i32, %c0_i32_0 : i32, i32
  }
  func.func @transform_2(%arg0: i32) -> (i32, i32) {
    %c0_i32 = arith.constant 0 : i32
    %c0_i32_0 = arith.constant 0 : i32
    %c0_i32_1 = arith.constant 0 : i32
    return %c0_i32, %c0_i32_0 : i32, i32
  }
  func.func @transform_3(%arg0: i32) -> (i32, i32) {
    %c0_i32 = arith.constant 0 : i32
    %c0_i32_0 = arith.constant 0 : i32
    return %arg0, %c0_i32 : i32, i32
  }
  func.func @transform_4(%arg0: i32) -> (i32, i32) {
    %c0_i32 = arith.constant 0 : i32
    %c0_i32_0 = arith.constant 0 : i32
    return %arg0, %c0_i32 : i32, i32
  }
}

</mosaic_0001>

<llo_original>
// kernel: tpu_custom_call.1
$region0: #{tpu_custom_call.1}
  #allocation0 [shape = 'u32[]', space=smem, size = 0x4, offset = 0x4, fixed_abs, tag = 'smem constant byte address 0x4 - core index']
  #allocation1 [shape = 'u32[144,128]{1,0:T(1,128)}', space=vmem, size = 0x12000, scoped, tag = 'internal scratch']
  %s0 = inlined_call_operand.hbm [shape: f32[37,128], index: 0, kind: input, shape index: {}]
  %s1 = inlined_call_operand.hbm [shape: f32[128,128], index: 1, kind: input, shape index: {}]
  %s2 = inlined_call_operand.vmem [shape: f32[1,128], index: 2, kind: input, shape index: {}]
  %s3 = inlined_call_operand.hbm [shape: f32[37,128], index: 3, kind: input, shape index: {}]
  %s4 = inlined_call_operand.hbm [shape: f32[37,128], index: 4, kind: output, shape index: {}]
  %s5 = sld [smem:[#allocation0]]
  $region61: #{tpu_custom_call.1} parent=0
    _
  %s7 = ssub.s32 1, %s5
  %s8 = scalar_select 0, %s7, %s5
  $region1: #{tpu_custom_call.1} parent=0
    #allocation2 [shape = 'u8[16384]{0}', space=vmem, size = 0x4000, scoped, tag = 'input window, operand 0']
    #allocation3 [shape = 's32[2]{0}', space=sflag, size = 0x8, scoped, tag = 'scoped memory for tpu_custom_call.1']
    #allocation4 [shape = 's32[2]{0}', space=sflag, size = 0x8, scoped, tag = 'scoped memory for tpu_custom_call.1']
    #allocation5 [shape = 'u8[65536]{0}', space=vmem, size = 0x10000, scoped, tag = 'input window, operand 1, single buffered']
    #allocation6 [shape = 's32[1]{0}', space=sflag, size = 0x4, scoped, tag = 'scoped memory for tpu_custom_call.1']
    #allocation7 [shape = 'u8[16384]{0}', space=vmem, size = 0x4000, scoped, tag = 'input window, operand 3']
    #allocation8 [shape = 'u8[16384]{0}', space=vmem, size = 0x4000, scoped, tag = 'output window, operand 0']
    %9 = vsyncpa [#allocation3], 0
    %s10 = scalar_lea.sflag [#allocation3], 1
    %11 = vsyncpa %s10, 0
    %12 = vsyncpa [#allocation6], 0
    %13 = vsyncpa [#allocation4], 0
    %s14 = scalar_lea.sflag [#allocation4], 1
    %15 = vsyncpa %s14, 0
    loop: start=0, step=1, limit=5
    $region2: #{tpu_custom_call.1} parent=1 // loop_pre_header
      _
    $region3: #{tpu_custom_call.1} parent=1 // loop_header
      %s17 = sphi 0, %s21
      %p18 = scmp.ge.s32.totalorder %s17, 5
      %s27 = sphi 0, %s29
      %s30 = sphi 0, %s27
      %s31 = sphi 0, %s30
      %s47 = sphi 0, %s31
      %s51 = sphi 0, %s51
      %s53 = sphi 0, %s51
      %s54 = sphi 0, %s53
      %s68 = sphi 0, %s54
      %s72 = sphi 0, %s72
      %s74 = sphi 0, %s72
      %s75 = sphi 0, %s74
      %s89 = sphi 0, %s75
      %s95 = sphi 0, %s97
      %s98 = sphi 0, %s95
      %s99 = sphi 0, %s98
      %s115 = sphi 0, %s99
      %s121 = sphi 0, %s123
      %s124 = sphi 0, %s121
      %s125 = sphi 0, %s124
      %s141 = sphi 0, %s125
    $region4: #{tpu_custom_call.1} parent=1 // loop_header_branch
      %20 = sbr.rel (%p18) target = $region8
    $region5: #{tpu_custom_call.1} parent=1 // loop_body
      %s22 = ssub.s32 %s17, 1
      %s23 = ssub.s32 %s17, 2
      %s24 = sadd.s32 %s17, 1
      %s25 = ssub.s32 %s17, %s24
      %p26 = scmp.eq.s32.totalorder %s25, 0
      %s28 = sadd.s32 %s27, 1
      %s29 = scalar_select %p26, %s27, %s28
      %p32 = pneg %p26
      %p33 = scmp.eq.s32.totalorder %s17, 2
      %p34 = por %p32, %p33
      %p35 = scmp.ne.s32.totalorder %s27, %s30
      %p36 = scmp.eq.s32.totalorder %s17, 0
      %p37 = por %p35, %p36
      %p38 = scmp.ne.s32.totalorder %s27, %s30
      %p39 = scmp.eq.s32.totalorder %s22, 2
      %p40 = por %p38, %p39
      %p41 = scmp.ne.s32.totalorder %s30, %s31
      %p42 = scmp.eq.s32.totalorder %s22, 0
      %p43 = por %p41, %p42
      %p44 = scmp.ne.s32.totalorder %s30, %s31
      %p45 = scmp.eq.s32.totalorder %s23, 2
      %p46 = por %p44, %p45
      %p48 = scmp.ne.s32.totalorder %s31, %s47
      %p49 = scmp.eq.s32.totalorder %s23, 0
      %p50 = por %p48, %p49
      %s52 = sadd.s32 %s51, 1
      %p55 = scmp.eq.s32.totalorder %s17, 2
      %p56 = scmp.ne.s32.totalorder %s51, %s53
      %p57 = scmp.eq.s32.totalorder %s17, 0
      %p58 = por %p56, %p57
      %p59 = scmp.ne.s32.totalorder %s51, %s53
      %p60 = scmp.eq.s32.totalorder %s22, 2
      %p61 = por %p59, %p60
      %p62 = scmp.ne.s32.totalorder %s53, %s54
      %p63 = scmp.eq.s32.totalorder %s22, 0
      %p64 = por %p62, %p63
      %p65 = scmp.ne.s32.totalorder %s53, %s54
      %p66 = scmp.eq.s32.totalorder %s23, 2
      %p67 = por %p65, %p66
      %p69 = scmp.ne.s32.totalorder %s54, %s68
      %p70 = scmp.eq.s32.totalorder %s23, 0
      %p71 = por %p69, %p70
      %s73 = sadd.s32 %s72, 1
      %p76 = scmp.eq.s32.totalorder %s17, 2
      %p77 = scmp.ne.s32.totalorder %s72, %s74
      %p78 = scmp.eq.s32.totalorder %s17, 0
      %p79 = por %p77, %p78
      %p80 = scmp.ne.s32.totalorder %s72, %s74
      %p81 = scmp.eq.s32.totalorder %s22, 2
      %p82 = por %p80, %p81
      %p83 = scmp.ne.s32.totalorder %s74, %s75
      %p84 = scmp.eq.s32.totalorder %s22, 0
      %p85 = por %p83, %p84
      %p86 = scmp.ne.s32.totalorder %s74, %s75
      %p87 = scmp.eq.s32.totalorder %s23, 2
      %p88 = por %p86, %p87
      %p90 = scmp.ne.s32.totalorder %s75, %s89
      %p91 = scmp.eq.s32.totalorder %s23, 0
      %p92 = por %p90, %p91
      %s93 = ssub.s32 %s17, %s24
      %p94 = scmp.eq.s32.totalorder %s93, 0
      %s96 = sadd.s32 %s95, 1
      %s97 = scalar_select %p94, %s95, %s96
      %p100 = pneg %p94
      %p101 = scmp.eq.s32.totalorder %s17, 2
      %p102 = por %p100, %p101
      %p103 = scmp.ne.s32.totalorder %s95, %s98
      %p104 = scmp.eq.s32.totalorder %s17, 0
      %p105 = por %p103, %p104
      %p106 = scmp.ne.s32.totalorder %s95, %s98
      %p107 = scmp.eq.s32.totalorder %s22, 2
      %p108 = por %p106, %p107
      %p109 = scmp.ne.s32.totalorder %s98, %s99
      %p110 = scmp.eq.s32.totalorder %s22, 0
      %p111 = por %p109, %p110
      %p112 = scmp.ne.s32.totalorder %s98, %s99
      %p113 = scmp.eq.s32.totalorder %s23, 2
      %p114 = por %p112, %p113
      %p116 = scmp.ne.s32.totalorder %s99, %s115
      %p117 = scmp.eq.s32.totalorder %s23, 0
      %p118 = por %p116, %p117
      %s119 = ssub.s32 %s17, %s24
      %p120 = scmp.eq.s32.totalorder %s119, 0
      %s122 = sadd.s32 %s121, 1
      %s123 = scalar_select %p120, %s121, %s122
      %p126 = pneg %p120
      %p127 = scmp.eq.s32.totalorder %s17, 2
      %p128 = por %p126, %p127
      %p129 = scmp.ne.s32.totalorder %s121, %s124
      %p130 = scmp.eq.s32.totalorder %s17, 0
      %p131 = por %p129, %p130
      %p132 = scmp.ne.s32.totalorder %s121, %s124
      %p133 = scmp.eq.s32.totalorder %s22, 2
      %p134 = por %p132, %p133
      %p135 = scmp.ne.s32.totalorder %s124, %s125
      %p136 = scmp.eq.s32.totalorder %s22, 0
      %p137 = por %p135, %p136
      %p138 = scmp.ne.s32.totalorder %s124, %s125
      %p139 = scmp.eq.s32.totalorder %s23, 2
      %p140 = por %p138, %p139
      %p142 = scmp.ne.s32.totalorder %s125, %s141
      %p143 = scmp.eq.s32.totalorder %s23, 0
      %p144 = por %p142, %p143
      %p145 = scmp.le.s32.totalorder 1, %s17
      %p146 = scmp.lt.s32.totalorder %s17, 4
      %p147 = pnand %p145, %p146
      %p148 = pneg %p147
      // Predicated region
      $region9: #{tpu_custom_call.1} parent=5 // pred_check
        _
      $region10: #{tpu_custom_call.1} parent=5 // pred_check_branch
        %150 = sbr.rel (%p147) target = $region12
      $region11: #{tpu_custom_call.1} parent=5 // pred_region
        %s151 = ssub.s32 %s17, 1
        // Predicated region
        $region13: #{tpu_custom_call.1} parent=11 // pred_check
          %p152 = pneg %p64
        $region14: #{tpu_custom_call.1} parent=11 // pred_check_branch
          %154 = sbr.rel (%p152) target = $region16
        $region15: #{tpu_custom_call.1} parent=11 // pred_region
          %s156 = ssub.s32 2048, 2048
          %157 = vsyncadd [#allocation6], %s156
          %s158 = sshll.u32 [#allocation5], 4
          %s159 = int_to_ptr.vmem [resolvable:$true] %s158
          %164 = dma.hbm_to_vmem [thread:$0]  %s1, 2048, %s159, [#allocation6], 128, 128, 8
        $region16: #{tpu_custom_call.1} parent=11 // pred_fallthru
          _
        // Predicated region
        $region17: #{tpu_custom_call.1} parent=11 // pred_check
          %p165 = pneg %p85
        $region18: #{tpu_custom_call.1} parent=11 // pred_check_branch
          %167 = sbr.rel (%p165) target = $region20
        $region19: #{tpu_custom_call.1} parent=11 // pred_region
          _
        $region20: #{tpu_custom_call.1} parent=11 // pred_fallthru
          _
      $region12: #{tpu_custom_call.1} parent=5 // pred_fallthru
        _
      %p168 = scmp.lt.s32.totalorder %s17, 3
      // Predicated region
      $region21: #{tpu_custom_call.1} parent=5 // pred_check
        %p169 = pneg %p168
      $region22: #{tpu_custom_call.1} parent=5 // pred_check_branch
        %171 = sbr.rel (%p169) target = $region24
      $region23: #{tpu_custom_call.1} parent=5 // pred_region
        // Predicated region
        $region25: #{tpu_custom_call.1} parent=23 // pred_check
          %p172 = pneg %p37
        $region26: #{tpu_custom_call.1} parent=23 // pred_check_branch
          %174 = sbr.rel (%p172) target = $region28
        $region27: #{tpu_custom_call.1} parent=23 // pred_region
          %s175 = sand.u32 %s17, 1
          %s176 = scalar_lea.sflag [#allocation3], %s175
          %s177 = sand.u32 %s27, 1
          %s178 = smul.addr %s177, 16
          %s179 = scalar_lea.vmem [#allocation2], %s178
          %s180 = smul.u32 2, %s17
          %s181 = ssub.s32 5, %s180
          %p182 = scmp.lt.s32.totalorder %s181, 2
          %s183 = scalar_select %p182, %s181, 2
          %s184 = smul.u32 128, %s183
          %s186 = ssub.s32 256, %s184
          %187 = vsyncadd %s176, %s186
          %p188 = scmp.ne.s32.totalorder 0, %s184
          %s189 = smul.addr %s180, 128
          %s190 = scalar_lea.hbm %s0, %s189
          %s191 = smul.u32 8, %s183
          %s192 = sshll.u32 %s179, 4
          %s193 = int_to_ptr.vmem [resolvable:$true] %s192
          %s194 = sshll.u32 %s191, 4
          %198 = dma.hbm_to_vmem [thread:$0]  (%p188), %s190, %s194, %s193, %s176, 128, 128, 8
        $region28: #{tpu_custom_call.1} parent=23 // pred_fallthru
          _
        // Predicated region
        $region29: #{tpu_custom_call.1} parent=23 // pred_check
          %p199 = pneg %p105
        $region30: #{tpu_custom_call.1} parent=23 // pred_check_branch
          %201 = sbr.rel (%p199) target = $region32
        $region31: #{tpu_custom_call.1} parent=23 // pred_region
          %s202 = sand.u32 %s17, 1
          %s203 = scalar_lea.sflag [#allocation3], %s202
          %s204 = sand.u32 %s95, 1
          %s205 = smul.addr %s204, 16
          %s206 = scalar_lea.vmem [#allocation7], %s205
          %s207 = smul.u32 2, %s17
          %s208 = ssub.s32 5, %s207
          %p209 = scmp.lt.s32.totalorder %s208, 2
          %s210 = scalar_select %p209, %s208, 2
          %s211 = smul.u32 128, %s210
          %s213 = ssub.s32 256, %s211
          %214 = vsyncadd %s203, %s213
          %p215 = scmp.ne.s32.totalorder 0, %s211
          %s216 = smul.addr %s207, 128
          %s217 = scalar_lea.hbm %s3, %s216
          %s218 = smul.u32 8, %s210
          %s219 = sshll.u32 %s206, 4
          %s220 = int_to_ptr.vmem [resolvable:$true] %s219
          %s221 = sshll.u32 %s218, 4
          %225 = dma.hbm_to_vmem [thread:$0]  (%p215), %s217, %s221, %s220, %s203, 128, 128, 8
        $region32: #{tpu_custom_call.1} parent=23 // pred_fallthru
          _
      $region24: #{tpu_custom_call.1} parent=5 // pred_fallthru
        _
      %p226 = scmp.le.s32.totalorder 1, %s17
      %p227 = scmp.lt.s32.totalorder %s17, 4
      %p228 = pnand %p226, %p227
      %p229 = pneg %p228
      // Predicated region
      $region33: #{tpu_custom_call.1} parent=5 // pred_check
        _
      $region34: #{tpu_custom_call.1} parent=5 // pred_check_branch
        %231 = sbr.rel (%p228) target = $region36
      $region35: #{tpu_custom_call.1} parent=5 // pred_region
        %s232 = ssub.s32 %s17, 1
        %s233 = sand.u32 %s22, 1
        %s234 = scalar_lea.sflag [#allocation3], %s233
        %s235 = sand.u32 %s30, 1
        %s236 = smul.addr %s235, 16
        %s237 = scalar_lea.vmem [#allocation2], %s236
        // Predicated region
        $region37: #{tpu_custom_call.1} parent=35 // pred_check
          %p238 = pneg %p43
        $region38: #{tpu_custom_call.1} parent=35 // pred_check_branch
          %240 = sbr.rel (%p238) target = $region40
        $region39: #{tpu_custom_call.1} parent=35 // pred_region
          %241 = dma.done %s234, 256
        $region40: #{tpu_custom_call.1} parent=35 // pred_fallthru
          _
        // Predicated region
        $region41: #{tpu_custom_call.1} parent=35 // pred_check
          %p242 = pneg %p64
        $region42: #{tpu_custom_call.1} parent=35 // pred_check_branch
          %244 = sbr.rel (%p242) target = $region44
        $region43: #{tpu_custom_call.1} parent=35 // pred_region
          %245 = dma.done [#allocation6], 2048
        $region44: #{tpu_custom_call.1} parent=35 // pred_fallthru
          _
        %s246 = sand.u32 %s22, 1
        %s247 = scalar_lea.sflag [#allocation3], %s246
        %s248 = sand.u32 %s98, 1
        %s249 = smul.addr %s248, 16
        %s250 = scalar_lea.vmem [#allocation7], %s249
        // Predicated region
        $region45: #{tpu_custom_call.1} parent=35 // pred_check
          %p251 = pneg %p111
        $region46: #{tpu_custom_call.1} parent=35 // pred_check_branch
          %253 = sbr.rel (%p251) target = $region48
        $region47: #{tpu_custom_call.1} parent=35 // pred_region
          %254 = dma.done %s247, 256
        $region48: #{tpu_custom_call.1} parent=35 // pred_fallthru
          _
        %s255 = sand.u32 %s22, 1
        %s256 = scalar_lea.sflag [#allocation3], %s255
        %s257 = sand.u32 %s30, 1
        %s258 = smul.addr %s257, 16
        %s259 = scalar_lea.vmem [#allocation2], %s258
        %p260 = pneg %p43
        %p261 = pneg %p40
        %p262 = pneg %p64
        %p263 = pneg %p61
        %p264 = pneg %p85
        %p265 = pneg %p82
        %s266 = sand.u32 %s22, 1
        %s267 = scalar_lea.sflag [#allocation3], %s266
        %s268 = sand.u32 %s98, 1
        %s269 = smul.addr %s268, 16
        %s270 = scalar_lea.vmem [#allocation7], %s269
        %p271 = pneg %p111
        %p272 = pneg %p108
        %p273 = pneg %p137
        %p274 = pneg %p134
        %s275 = sand.u32 %s124, 1
        %s276 = scalar_lea.sflag [#allocation4], %s275
        %s277 = sand.u32 %s124, 1
        %s278 = smul.addr %s277, 16
        %s279 = scalar_lea.vmem [#allocation8], %s278
        %s280 = smul.u32 2, %s22
        %s281 = ssub.s32 5, %s280
        %p282 = scmp.lt.s32.totalorder %s281, 2
        %s283 = scalar_select %p282, %s281, 2
        %s284 = smul.u32 128, %s283
        %s285 = smul.u32 2, %s22
        %s286 = ssub.s32 5, %s285
        %p287 = scmp.lt.s32.totalorder %s286, 2
        %s288 = scalar_select %p287, %s286, 2
        %s289 = smul.u32 128, %s288
        %s290 = smul.u32 2, %s22
        %s291 = ssub.s32 5, %s290
        %p292 = scmp.lt.s32.totalorder %s291, 2
        %s293 = scalar_select %p292, %s291, 2
        %s294 = smul.u32 128, %s293
        %v295 = vld [vmem:[%s237] sm:$0xff]
        %v296 = vld [vmem:[%s237 + $0x8] sm:$0xff]
        %v297 = vld [vmem:[#allocation5] sm:$0xff]
        %v298 = vld [vmem:[#allocation5 + $0x8] sm:$0xff]
        %v299 = vld [vmem:[#allocation5 + $0x10] sm:$0xff]
        %v300 = vld [vmem:[#allocation5 + $0x18] sm:$0xff]
        %v301 = vld [vmem:[#allocation5 + $0x20] sm:$0xff]
        %v302 = vld [vmem:[#allocation5 + $0x28] sm:$0xff]
        %v303 = vld [vmem:[#allocation5 + $0x30] sm:$0xff]
        %v304 = vld [vmem:[#allocation5 + $0x38] sm:$0xff]
        %v305 = vld [vmem:[#allocation5 + $0x40] sm:$0xff]
        %v306 = vld [vmem:[#allocation5 + $0x48] sm:$0xff]
        %v307 = vld [vmem:[#allocation5 + $0x50] sm:$0xff]
        %v308 = vld [vmem:[#allocation5 + $0x58] sm:$0xff]
        %v309 = vld [vmem:[#allocation5 + $0x60] sm:$0xff]
        %v310 = vld [vmem:[#allocation5 + $0x68] sm:$0xff]
        %v311 = vld [vmem:[#allocation5 + $0x70] sm:$0xff]
        %v312 = vld [vmem:[#allocation5 + $0x78] sm:$0xff]
        %v313 = vld [vmem:[%s2] sm:$0x1]
        %v315 = vlaneseq
        %v316 = vshrl.u32 %v315, 7
        %v317 = vsub.s32 0, %v316
        %v318 = vrot.slane %v313, %v317
        %320 = vmatprep.subr.mxu0 0.0
        %321 = vmatpush1.msra.mxu0 %v297
        %322 = vmatprep.subr.mxu0 0.0
        %323 = vmatpush1.msra.mxu0 %v298
        %324 = vmatprep.subr.mxu0 0.0
        %325 = vmatpush1.msra.mxu0 %v299
        %326 = vmatprep.subr.mxu0 0.0
        %327 = vmatpush1.msra.mxu0 %v300
        %328 = vmatprep.subr.mxu0 0.0
        %329 = vmatpush1.msra.mxu0 %v301
        %330 = vmatprep.subr.mxu0 0.0
        %331 = vmatpush1.msra.mxu0 %v302
        %332 = vmatprep.subr.mxu0 0.0
        %333 = vmatpush1.msra.mxu0 %v303
        %334 = vmatprep.subr.mxu0 0.0
        %335 = vmatpush1.msra.mxu0 %v304
        %336 = vmatprep.subr.mxu0 0.0
        %337 = vmatpush1.msra.mxu0 %v305
        %338 = vmatprep.subr.mxu0 0.0
        %339 = vmatpush1.msra.mxu0 %v306
        %340 = vmatprep.subr.mxu0 0.0
        %341 = vmatpush1.msra.mxu0 %v307
        %342 = vmatprep.subr.mxu0 0.0
        %343 = vmatpush1.msra.mxu0 %v308
        %344 = vmatprep.subr.mxu0 0.0
        %345 = vmatpush1.msra.mxu0 %v309
        %346 = vmatprep.subr.mxu0 0.0
        %347 = vmatpush1.msra.mxu0 %v310
        %348 = vmatprep.subr.mxu0 0.0
        %349 = vmatpush1.msra.mxu0 %v311
        %350 = vmatprep.subr.mxu0 0.0
        %351 = vmatpush1.msra.mxu0 %v312
        %352 = vmatprep.subr.mxu0 0.0
        %353 = vmatpush1.msra.mxu0 0.0
        %354 = vmatprep.subr.mxu0 0.0
        %355 = vmatpush1.msra.mxu0 0.0
        %356 = vmatprep.subr.mxu0 0.0
        %357 = vmatpush1.msra.mxu0 0.0
        %358 = vmatprep.subr.mxu0 0.0
        %359 = vmatpush1.msra.mxu0 0.0
        %360 = vmatprep.subr.mxu0 0.0
        %361 = vmatpush1.msra.mxu0 0.0
        %362 = vmatprep.subr.mxu0 0.0
        %363 = vmatpush1.msra.mxu0 0.0
        %364 = vmatprep.subr.mxu0 0.0
        %365 = vmatpush1.msra.mxu0 0.0
        %366 = vmatprep.subr.mxu0 0.0
        %367 = vmatpush1.msra.mxu0 0.0
        %368 = vmatprep.subr.mxu0 0.0
        %369 = vmatpush1.msra.mxu0 0.0
        %370 = vmatprep.subr.mxu0 0.0
        %371 = vmatpush1.msra.mxu0 0.0
        %372 = vmatprep.subr.mxu0 0.0
        %373 = vmatpush1.msra.mxu0 0.0
        %374 = vmatprep.subr.mxu0 0.0
        %375 = vmatpush1.msra.mxu0 0.0
        %376 = vmatprep.subr.mxu0 0.0
        %377 = vmatpush1.msra.mxu0 0.0
        %378 = vmatprep.subr.mxu0 0.0
        %379 = vmatpush1.msra.mxu0 0.0
        %380 = vmatprep.subr.mxu0 0.0
        %381 = vmatpush1.msra.mxu0 0.0
        %382 = vmatprep.subr.mxu0 0.0
        %383 = vmatpush1.msra.mxu0 0.0
        %384 = vmatprep.mubr.f32.mxu0 0.0
        %385 = vmatmul.mubr.f32.gmra.mrb[0].mxu0 %v295
        %v386 = vpop.f32.mrb[0].mxu0
        %v387 = vadd.f32 %v318, %v386
        %v388 = vpop.f32.mrb[0].mxu0
        %389 = vmatprep.mubr.f32.mxu0 0.0
        %390 = vmatmul.mubr.f32.gmra.mrb[0].mxu0 %v296
        %v391 = vpop.f32.mrb[0].mxu0
        %v392 = vadd.f32 %v318, %v391
        %v393 = vpop.f32.mrb[0].mxu0
        %394 = vdwg.mxu0
        %v395 = vld [vmem:[%s250] sm:$0xff]
        %v396 = vld [vmem:[%s250 + $0x8] sm:$0xff]
        %v397 = vadd.f32 %v387, %v395
        %v398 = vadd.f32 %v392, %v396
        %399 = vst [vmem:[%s279] sm:$0xff] %v397
        %400 = vst [vmem:[%s279 + $0x8] sm:$0xff] %v398
        %s401 = sand.u32 %s124, 1
        %s402 = scalar_lea.sflag [#allocation4], %s401
        %s403 = sand.u32 %s124, 1
        %s404 = smul.addr %s403, 16
        %s405 = scalar_lea.vmem [#allocation8], %s404
        // Predicated region
        $region49: #{tpu_custom_call.1} parent=35 // pred_check
          %p406 = pneg %p134
        $region50: #{tpu_custom_call.1} parent=35 // pred_check_branch
          %408 = sbr.rel (%p406) target = $region52
        $region51: #{tpu_custom_call.1} parent=35 // pred_region
          %s409 = smul.u32 2, %s22
          %s410 = ssub.s32 5, %s409
          %p411 = scmp.lt.s32.totalorder %s410, 2
          %s412 = scalar_select %p411, %s410, 2
          %s413 = smul.u32 128, %s412
          %s415 = ssub.s32 256, %s413
          %416 = vsyncadd %s402, %s415
          %p417 = scmp.ne.s32.totalorder 0, %s413
          %s418 = smul.addr %s409, 128
          %s419 = scalar_lea.hbm %s4, %s418
          %s420 = smul.u32 8, %s412
          %s421 = sshll.u32 %s405, 4
          %s422 = int_to_ptr.vmem [resolvable:$true] %s421
          %s423 = sshll.u32 %s420, 4
          %427 = dma.vmem_to_hbm [thread:$0]  (%p417), %s422, %s423, %s419, %s402, 128, 128, 8
        $region52: #{tpu_custom_call.1} parent=35 // pred_fallthru
          _
      $region36: #{tpu_custom_call.1} parent=5 // pred_fallthru
        _
      %p428 = scmp.le.s32.totalorder 2, %s17
      // Predicated region
      $region53: #{tpu_custom_call.1} parent=5 // pred_check
        %p429 = pneg %p428
      $region54: #{tpu_custom_call.1} parent=5 // pred_check_branch
        %431 = sbr.rel (%p429) target = $region56
      $region55: #{tpu_custom_call.1} parent=5 // pred_region
        %s432 = ssub.s32 %s17, 2
        // Predicated region
        $region57: #{tpu_custom_call.1} parent=55 // pred_check
          %p433 = pneg %p140
        $region58: #{tpu_custom_call.1} parent=55 // pred_check_branch
          %435 = sbr.rel (%p433) target = $region60
        $region59: #{tpu_custom_call.1} parent=55 // pred_region
          %s436 = sand.u32 %s125, 1
          %s437 = scalar_lea.sflag [#allocation4], %s436
          %s438 = sand.u32 %s125, 1
          %s439 = smul.addr %s438, 16
          %s440 = scalar_lea.vmem [#allocation8], %s439
          %441 = dma.done %s437, 256
        $region60: #{tpu_custom_call.1} parent=55 // pred_fallthru
          _
      $region56: #{tpu_custom_call.1} parent=5 // pred_fallthru
        _
    $region6: #{tpu_custom_call.1} parent=1 // loop_footer
      %s21 = sadd.s32 1, %s17
    $region7: #{tpu_custom_call.1} parent=1 // loop_footer_branch
      %16 = sbr.rel target = $region3
    $region8: #{tpu_custom_call.1} parent=1 // loop_exit
      _
    %442 = vsyncpa [#allocation3], 1
    %s443 = scalar_lea.sflag [#allocation3], 1
    %444 = vsyncpa %s443, 1
    %445 = vsyncpa [#allocation6], 1
    %446 = vsyncpa [#allocation4], 1
    %s447 = scalar_lea.sflag [#allocation4], 1
    %448 = vsyncpa %s447, 1

</llo_original>
